<compile_context>
chip_gen: v5e
topology: v5e:2x2
jax: 0.10.0
libtpu: 0.0.40
codegen_flags: <defaults>
</compile_context>

<pallas_src>
import functools

import jax
import jax.numpy as jnp
from jax.experimental import pallas as pl
from jax.experimental.pallas import tpu as pltpu


_LANES = 512                           # lane-dense last dim (multiple of 128)
_ROW_ALIGN = 8                         # sublane multiple
_ALIGN_ELEMS = _ROW_ALIGN * _LANES     # 4096-element alignment for zero-copy path
_TARGET_TILE_BYTES = 2 * 1024 * 1024   # ~2 MiB per streamed input buffer


def _num_splits_and_semantics():
    """(number of grid splits, dimension semantics for the split axis).

    v7x has 2 TensorCores per chip -> 2-way CORE_PARALLEL split so both TCs
    issue DMAs.  v5e / v6e (and anything unrecognised) expose a single
    TensorCore -> single split (the extra axis would be pure overhead).
    """
    try:
        kind = jax.devices()[0].device_kind.lower()
    except Exception:
        kind = ""
    if "v7" in kind:
        return 2, getattr(pltpu, "CORE_PARALLEL", "parallel")
    return 1, "parallel"


def _vae_loss_kernel(x_ref, r_ref, mu_ref, lv_ref, out_ref, acc_ref, *,
                     inv_n_img, inv_n_lat, tile_r, rows_valid, need_mask):
    c = pl.program_id(0)   # split (TensorCore) index
    i = pl.program_id(1)   # streaming row-block index within the split

    @pl.when(i == 0)
    def _init():
        acc_ref[...] = jnp.zeros_like(acc_ref)

    # Elementwise squared error in f32 (pure VPU; hidden under the HBM DMA).
    x = x_ref[...].astype(jnp.float32)
    r = r_ref[...].astype(jnp.float32)
    d = r - x
    sq = d * d

    if need_mask:
        # Ragged last block (and, for a 2-way split, a possible clamped
        # duplicate block): mask by *logical* global row id so out-of-range
        # rows (garbage) contribute nothing.
        blk = c * pl.num_programs(1) + i
        row0 = blk * tile_r
        rid = jax.lax.broadcasted_iota(jnp.int32, (tile_r, _LANES), 0) + row0
        sq = jnp.where(rid < rows_valid, sq, 0.0)

    # Sublane-fold into a small (8, _LANES) accumulator: removes the full-tile
    # acc load/store stream and shrinks the finalize cross-lane reduce ~128x.
    acc_ref[...] += sq.reshape(tile_r // _ROW_ALIGN, _ROW_ALIGN, _LANES).sum(axis=0)

    @pl.when(i == pl.num_programs(1) - 1)
    def _finalize():
        partial_mse = jnp.sum(acc_ref[...]) * inv_n_img
        out_ref[0, 0] = partial_mse

        # KL term: tiny, VMEM-resident; computed on split 0 only.
        @pl.when(c == 0)
        def _kl():
            mu = mu_ref[...].astype(jnp.float32)
            lv = jnp.clip(lv_ref[...].astype(jnp.float32), -100.0, 100.0)
            kld = -0.5 * (jnp.sum(1.0 + lv - mu * mu - jnp.exp(lv)) * inv_n_lat)
            out_ref[0, 0] = partial_mse + kld


def vae_loss_ref(x, recon_x, mu, logvar):
    """Pure-JAX reference mirroring the PyTorch module exactly."""
    img_loss = jnp.mean((recon_x.astype(jnp.float32) - x.astype(jnp.float32)) ** 2)
    lv = jnp.clip(logvar.astype(jnp.float32), -100.0, 100.0)
    kld = -0.5 * jnp.mean(1.0 + lv - mu.astype(jnp.float32) ** 2 - jnp.exp(lv))
    return img_loss + kld


def vae_loss(x, recon_x, mu, logvar, *, min_pallas_elements=65536):
    """Pallas implementation of VAELoss.forward.

    x, recon_x : same shape (e.g. NCHW images), any float dtype
    mu, logvar : same shape (e.g. [batch, latent_dim])
    returns    : scalar f32 loss
    """
    assert x.shape == recon_x.shape
    assert mu.shape == logvar.shape

    n_img = int(x.size)
    n_lat = int(mu.size)

    # Tiny inputs: fixed pallas_call + per-step overhead dominates -> pure JAX.
    if n_img < min_pallas_elements:
        return vae_loss_ref(x, recon_x, mu, logvar)

    # ---- lane-dense layout: flatten to (rows, 512), zero-copy when possible --
    xf = x.reshape(-1)
    rf = recon_x.reshape(-1)
    rem = n_img % _ALIGN_ELEMS
    if rem:
        # Fallback only for sizes not divisible by 4096 elements.  Identical
        # zero padding for x and recon -> diff == 0 there -> no contribution.
        pad = _ALIGN_ELEMS - rem
        xf = jnp.pad(xf, (0, pad))
        rf = jnp.pad(rf, (0, pad))
    rows = xf.shape[0] // _LANES        # multiple of 8 by construction
    x2 = xf.reshape(rows, _LANES)
    r2 = rf.reshape(rows, _LANES)

    mu2 = mu.reshape(-1, mu.shape[-1])
    lv2 = logvar.reshape(-1, logvar.shape[-1])

    # ---- tiling ----
    itemsize = jnp.dtype(x2.dtype).itemsize
    tile_rows_target = max(
        _ROW_ALIGN,
        (_TARGET_TILE_BYTES // (_LANES * itemsize)) // _ROW_ALIGN * _ROW_ALIGN)
    tile_r = int(min(tile_rows_target, rows))       # multiple of 8, <= rows

    total_blocks = pl.cdiv(rows, tile_r)
    num_splits, split_sem = _num_splits_and_semantics()
    num_splits = max(1, min(num_splits, total_blocks))
    bps = pl.cdiv(total_blocks, num_splits)         # blocks per split

    need_mask = (rows % tile_r != 0) or (total_blocks % num_splits != 0)

    kernel = functools.partial(
        _vae_loss_kernel,
        inv_n_img=1.0 / float(n_img),
        inv_n_lat=1.0 / float(n_lat),
        tile_r=tile_r,
        rows_valid=rows,
        need_mask=need_mask,
    )

    if total_blocks % num_splits == 0:
        def img_index_map(c, i):
            return (c * bps + i, 0)
    else:
        def img_index_map(c, i):
            # Clamp so the DMA window stays inside the array; logically
            # out-of-range blocks are masked to zero inside the kernel.
            return (jnp.minimum(c * bps + i, total_blocks - 1), 0)

    img_spec = pl.BlockSpec((tile_r, _LANES), img_index_map)
    mu_spec = pl.BlockSpec(mu2.shape, lambda c, i: (0, 0))
    lv_spec = pl.BlockSpec(lv2.shape, lambda c, i: (0, 0))

    # VMEM budget derived from the actual footprint (+ generous headroom).
    tile_bytes = tile_r * _LANES * itemsize
    stat_bytes = (mu2.size * jnp.dtype(mu2.dtype).itemsize
                  + lv2.size * jnp.dtype(lv2.dtype).itemsize)
    vmem_limit = int(2 * 2 * tile_bytes            # 2 inputs x double-buffer
                     + 2 * stat_bytes              # resident mu / logvar
                     + _ROW_ALIGN * _LANES * 4     # accumulator
                     + (4 << 20))                  # compiler scratch headroom
    vmem_limit = min(max(vmem_limit, 8 << 20), 64 << 20)

    partials = pl.pallas_call(
        kernel,
        out_shape=jax.ShapeDtypeStruct((num_splits, 1), jnp.float32),
        grid_spec=pltpu.PrefetchScalarGridSpec(
            num_scalar_prefetch=0,
            grid=(num_splits, bps),
            in_specs=[img_spec, img_spec, mu_spec, lv_spec],
            out_specs=pl.BlockSpec((1, 1), lambda c, i: (c, 0),
                                   memory_space=pltpu.SMEM),
            scratch_shapes=[pltpu.VMEM((_ROW_ALIGN, _LANES), jnp.float32)],
        ),
        compiler_params=pltpu.CompilerParams(
            dimension_semantics=(split_sem, "arbitrary"),
            vmem_limit_bytes=vmem_limit,
        ),
    )(x2, r2, mu2, lv2)

    # Combine the (at most num_splits) per-split partials: tiny wrapper sum.
    return jnp.sum(partials)


if __name__ == "__main__":
    key = jax.random.PRNGKey(0)
    ks = jax.random.split(key, 12)

    vae_loss_jit = jax.jit(vae_loss, static_argnames=("min_pallas_elements",))

    # 1) Small canonical VAE shapes (forced through the Pallas path).
    x = jax.random.normal(ks[0], (2, 4, 16, 16), dtype=jnp.float32)
    rx = jax.random.normal(ks[1], (2, 4, 16, 16), dtype=jnp.float32)
    mu = jax.random.normal(ks[2], (2, 32), dtype=jnp.float32)
    lv = jax.random.normal(ks[3], (2, 32), dtype=jnp.float32)
    out1 = vae_loss_jit(x, rx, mu, lv, min_pallas_elements=0)
    jax.block_until_ready(out1)
    ref1 = vae_loss_ref(x, rx, mu, lv)
    assert jnp.allclose(out1, ref1, rtol=1e-4, atol=1e-5), (out1, ref1)

    # 2) Lane/row-unaligned size (exercises the small 4096-elem pad fallback).
    xb = jax.random.normal(ks[4], (2, 3, 15, 17), dtype=jnp.float32)
    rb = jax.random.normal(ks[5], (2, 3, 15, 17), dtype=jnp.float32)
    out2 = vae_loss_jit(xb, rb, mu, lv, min_pallas_elements=0)
    jax.block_until_ready(out2)
    ref2 = vae_loss_ref(xb, rb, mu, lv)
    assert jnp.allclose(out2, ref2, rtol=1e-4, atol=1e-5), (out2, ref2)

    # 3) 4096-aligned (zero-copy path), multi-block, ragged-last-block mask.
    xc = jax.random.normal(ks[6], (129, 32, 128), dtype=jnp.float32)
    rc = jax.random.normal(ks[7], (129, 32, 128), dtype=jnp.float32)
    muc = jax.random.normal(ks[8], (8, 64), dtype=jnp.float32)
    lvc = jax.random.normal(ks[9], (8, 64), dtype=jnp.float32)
    out3 = vae_loss_jit(xc, rc, muc, lvc)
    jax.block_until_ready(out3)
    ref3 = vae_loss_ref(xc, rc, muc, lvc)
    assert jnp.allclose(out3, ref3, rtol=1e-4, atol=1e-5), (out3, ref3)

    # 4) bf16 images (larger tile rows, f32 accumulation).
    xd = jax.random.normal(ks[10], (16, 4, 64, 64), dtype=jnp.bfloat16)
    rd = jax.random.normal(ks[11], (16, 4, 64, 64), dtype=jnp.bfloat16)
    out4 = vae_loss_jit(xd, rd, mu, lv)
    jax.block_until_ready(out4)
    ref4 = vae_loss_ref(xd, rd, mu, lv)
    assert jnp.allclose(out4, ref4, rtol=1e-4, atol=1e-5), (out4, ref4)

    print("KERNEL_OK")
</pallas_src>

<mosaic_0001>
module attributes {stable_mosaic.version = 11 : i64} {
  func.func @_vae_loss_kernel(%arg0: i32, %arg1: i32, %arg2: memref<8x512xf32, #tpu.memory_space<vmem>>, %arg3: memref<8x512xf32, #tpu.memory_space<vmem>>, %arg4: memref<2x32xf32, #tpu.memory_space<vmem>>, %arg5: memref<2x32xf32, #tpu.memory_space<vmem>>, %arg6: memref<1x1xf32, #tpu.memory_space<smem>>, %arg7: memref<8x512xf32, #tpu.memory_space<vmem>>) attributes {dimension_semantics = [#tpu.dimension_semantics<parallel>, #tpu.dimension_semantics<arbitrary>], iteration_bounds = array<i64: 1, 1>, scalar_prefetch = 0 : i64, scratch_operands = 1 : i64, tpu.core_type = #tpu.core_type<tc>, window_params = [{transform_indices = @transform_0, window_bounds = array<i64: 8, 512>}, {transform_indices = @transform_1, window_bounds = array<i64: 8, 512>}, {pipeline_mode = #tpu.pipeline_mode<synchronous>, transform_indices = @transform_2, window_bounds = array<i64: 2, 32>}, {pipeline_mode = #tpu.pipeline_mode<synchronous>, transform_indices = @transform_3, window_bounds = array<i64: 2, 32>}, {transform_indices = @transform_4, window_bounds = array<i64: 1, 1>}]} {
    %c0_i32 = arith.constant 0 : i32
    %0 = arith.cmpi eq, %arg1, %c0_i32 : i32
    %1 = arith.extui %0 : i1 to i32
    %c0_i32_0 = arith.constant 0 : i32
    %2 = arith.cmpi ne, %1, %c0_i32_0 : i32
    scf.if %2 {
      %cst_10 = arith.constant 0.000000e+00 : f32
      %15 = vector.broadcast %cst_10 : f32 to vector<8x512xf32>
      %c0_11 = arith.constant 0 : index
      %c0_12 = arith.constant 0 : index
      %16 = vector.load %arg7[%c0_11, %c0_12] : memref<8x512xf32, #tpu.memory_space<vmem>>, vector<8x512xf32>
      tpu.vector_store %arg7[%c0_11, %c0_12], %15 {strides = array<i32>} : memref<8x512xf32, #tpu.memory_space<vmem>>, vector<8x512xf32>,
    } else {
    }
    %c0 = arith.constant 0 : index
    %c0_1 = arith.constant 0 : index
    %3 = vector.load %arg2[%c0, %c0_1] : memref<8x512xf32, #tpu.memory_space<vmem>>, vector<8x512xf32>
    %c0_2 = arith.constant 0 : index
    %c0_3 = arith.constant 0 : index
    %4 = vector.load %arg3[%c0_2, %c0_3] : memref<8x512xf32, #tpu.memory_space<vmem>>, vector<8x512xf32>
    %5 = arith.subf %4, %3 : vector<8x512xf32>
    %6 = arith.mulf %5, %5 : vector<8x512xf32>
    %c0_4 = arith.constant 0 : index
    %c0_5 = arith.constant 0 : index
    %7 = vector.load %arg7[%c0_4, %c0_5] : memref<8x512xf32, #tpu.memory_space<vmem>>, vector<8x512xf32>
    %8 = vector.shape_cast %6 : vector<8x512xf32> to vector<1x8x512xf32>
    %cst = arith.constant dense<0.000000e+00> : vector<8x512xf32>
    %9 = vector.multi_reduction <add>, %8, %cst [0] : vector<1x8x512xf32> to vector<8x512xf32>
    %10 = arith.addf %7, %9 : vector<8x512xf32>
    %c0_6 = arith.constant 0 : index
    %c0_7 = arith.constant 0 : index
    %11 = vector.load %arg7[%c0_6, %c0_7] : memref<8x512xf32, #tpu.memory_space<vmem>>, vector<8x512xf32>
    tpu.vector_store %arg7[%c0_6, %c0_7], %10 {strides = array<i32>} : memref<8x512xf32, #tpu.memory_space<vmem>>, vector<8x512xf32>,
    %c0_i32_8 = arith.constant 0 : i32
    %12 = arith.cmpi eq, %arg1, %c0_i32_8 : i32
    %13 = arith.extui %12 : i1 to i32
    %c0_i32_9 = arith.constant 0 : i32
    %14 = arith.cmpi ne, %13, %c0_i32_9 : i32
    scf.if %14 {
      %c0_10 = arith.constant 0 : index
      %c0_11 = arith.constant 0 : index
      %15 = vector.load %arg7[%c0_10, %c0_11] : memref<8x512xf32, #tpu.memory_space<vmem>>, vector<8x512xf32>
      %16 = vector.shape_cast %15 : vector<8x512xf32> to vector<1x8x512xf32>
      %cst_12 = arith.constant dense<0.000000e+00> : vector<1xf32>
      %17 = vector.multi_reduction <add>, %16, %cst_12 [1, 2] : vector<1x8x512xf32> to vector<1xf32>
      %18 = vector.shape_cast %17 : vector<1xf32> to vector<1x1x1xf32>
      %19 = vector.extract %18[0, 0, 0] : f32 from vector<1x1x1xf32>
      %cst_13 = arith.constant 4.8828125E-4 : f32
      %20 = arith.mulf %19, %cst_13 : f32
      %c0_14 = arith.constant 0 : index
      %c0_15 = arith.constant 0 : index
      %21 = memref.load %arg6[%c0_14, %c0_15] : memref<1x1xf32, #tpu.memory_space<smem>>
      memref.store %20, %arg6[%c0_14, %c0_15] : memref<1x1xf32, #tpu.memory_space<smem>>
      %c0_i32_16 = arith.constant 0 : i32
      %22 = arith.cmpi eq, %arg0, %c0_i32_16 : i32
      %23 = arith.extui %22 : i1 to i32
      %c0_i32_17 = arith.constant 0 : i32
      %24 = arith.cmpi ne, %23, %c0_i32_17 : i32
      scf.if %24 {
        %c0_18 = arith.constant 0 : index
        %c0_19 = arith.constant 0 : index
        %25 = vector.load %arg4[%c0_18, %c0_19] : memref<2x32xf32, #tpu.memory_space<vmem>>, vector<2x32xf32>
        %c0_20 = arith.constant 0 : index
        %c0_21 = arith.constant 0 : index
        %26 = vector.load %arg5[%c0_20, %c0_21] : memref<2x32xf32, #tpu.memory_space<vmem>>, vector<2x32xf32>
        %cst_22 = arith.constant -1.000000e+02 : f32
        %cst_23 = arith.constant 1.000000e+02 : f32
        %27 = vector.broadcast %cst_22 : f32 to vector<2x32xf32>
        %28 = arith.maximumf %27, %26 : vector<2x32xf32>
        %29 = vector.broadcast %cst_23 : f32 to vector<2x32xf32>
        %30 = arith.minimumf %29, %28 : vector<2x32xf32>
        %cst_24 = arith.constant 1.000000e+00 : f32
        %31 = vector.broadcast %cst_24 : f32 to vector<2x32xf32>
        %32 = arith.addf %31, %30 : vector<2x32xf32>
        %33 = arith.mulf %25, %25 : vector<2x32xf32>
        %34 = arith.subf %32, %33 : vector<2x32xf32>
        %35 = math.exp %30 : vector<2x32xf32>
        %36 = arith.subf %34, %35 : vector<2x32xf32>
        %37 = vector.shape_cast %36 : vector<2x32xf32> to vector<1x2x32xf32>
        %cst_25 = arith.constant dense<0.000000e+00> : vector<1xf32>
        %38 = vector.multi_reduction <add>, %37, %cst_25 [1, 2] : vector<1x2x32xf32> to vector<1xf32>
        %39 = vector.shape_cast %38 : vector<1xf32> to vector<1x1x1xf32>
        %40 = vector.extract %39[0, 0, 0] : f32 from vector<1x1x1xf32>
        %cst_26 = arith.constant 1.562500e-02 : f32
        %41 = arith.mulf %40, %cst_26 : f32
        %cst_27 = arith.constant -5.000000e-01 : f32
        %42 = arith.mulf %cst_27, %41 : f32
        %43 = arith.addf %20, %42 : f32
        %c0_28 = arith.constant 0 : index
        %c0_29 = arith.constant 0 : index
        %44 = memref.load %arg6[%c0_28, %c0_29] : memref<1x1xf32, #tpu.memory_space<smem>>
        memref.store %43, %arg6[%c0_28, %c0_29] : memref<1x1xf32, #tpu.memory_space<smem>>
      } else {
      }
    } else {
    }
    return
  }
  func.func @transform_0(%arg0: i32, %arg1: i32) -> (i32, i32) {
    %c1_i32 = arith.constant 1 : i32
    %0 = arith.muli %arg0, %c1_i32 : i32
    %1 = arith.addi %0, %arg1 : i32
    %c0_i32 = arith.constant 0 : i32
    %c0_i32_0 = arith.constant 0 : i32
    return %1, %c0_i32 : i32, i32
  }
  func.func @transform_1(%arg0: i32, %arg1: i32) -> (i32, i32) {
    %c1_i32 = arith.constant 1 : i32
    %0 = arith.muli %arg0, %c1_i32 : i32
    %1 = arith.addi %0, %arg1 : i32
    %c0_i32 = arith.constant 0 : i32
    %c0_i32_0 = arith.constant 0 : i32
    return %1, %c0_i32 : i32, i32
  }
  func.func @transform_2(%arg0: i32, %arg1: i32) -> (i32, i32) {
    %c0_i32 = arith.constant 0 : i32
    %c0_i32_0 = arith.constant 0 : i32
    %c0_i32_1 = arith.constant 0 : i32
    return %c0_i32, %c0_i32_0 : i32, i32
  }
  func.func @transform_3(%arg0: i32, %arg1: i32) -> (i32, i32) {
    %c0_i32 = arith.constant 0 : i32
    %c0_i32_0 = arith.constant 0 : i32
    %c0_i32_1 = arith.constant 0 : i32
    return %c0_i32, %c0_i32_0 : i32, i32
  }
  func.func @transform_4(%arg0: i32, %arg1: i32) -> (i32, i32) {
    %c0_i32 = arith.constant 0 : i32
    %c0_i32_0 = arith.constant 0 : i32
    return %arg0, %c0_i32 : i32, i32
  }
}

</mosaic_0001>

<llo_original>
// kernel: vae_loss.1
$region0: #{vae_loss.1}
  #allocation0 [shape = 'u32[]', space=smem, size = 0x4, offset = 0x4, fixed_abs, tag = 'smem constant byte address 0x4 - core index']
  #allocation1 [shape = 'u32[72,128]{1,0:T(1,128)}', space=vmem, size = 0x9000, scoped, tag = 'internal scratch']
  #allocation2 [shape = 'f32[8,512]{1,0:T(8,128)}', space=vmem, size = 0x4000, scoped, tag = 'scratch operand']
  %s0 = inlined_call_operand.vmem [shape: f32[8,512], index: 0, kind: input, shape index: {}]
  %s1 = inlined_call_operand.vmem [shape: f32[8,512], index: 1, kind: input, shape index: {}]
  %s2 = inlined_call_operand.vmem [shape: f32[2,32], index: 2, kind: input, shape index: {}]
  %s3 = inlined_call_operand.vmem [shape: f32[2,32], index: 3, kind: input, shape index: {}]
  %s4 = inlined_call_operand.hbm [shape: f32[1,1], index: 4, kind: output, shape index: {}]
  %s5 = sld [smem:[#allocation0]]
  $region38: #{vae_loss.1} parent=0
    _
  %s7 = ssub.s32 1, %s5
  %s8 = scalar_select 0, %s7, %s5
  $region1: #{vae_loss.1} parent=0
    #allocation3 [shape = 'u8[512]{0}', space=smem, size = 0x200, scoped, tag = 'output window, operand 0, single buffered']
    #allocation4 [shape = 's32[1]{0}', space=sflag, size = 0x4, scoped, tag = 'scoped memory for vae_loss.1']
    %9 = vsyncpa [#allocation4], 0
    // Predicated region
    $region2: #{vae_loss.1} parent=1 // pred_check
      _
    $region3: #{vae_loss.1} parent=1 // pred_check_branch
      %11 = sbr.rel (0) target = $region5
    $region4: #{vae_loss.1} parent=1 // pred_region
      %s12 = sadd.s32 0, 0
      %p13 = scmp.lt.s32.totalorder %s12, 0
      %s14 = scalar_select %p13, %s12, 0
      %s15 = smul.addr %s14, 4
      %s16 = smul.addr %s15, 8
      %s17 = scalar_lea.vmem %s0, %s16
      %s18 = sadd.s32 0, 0
    $region5: #{vae_loss.1} parent=1 // pred_fallthru
      _
    // Predicated region
    $region6: #{vae_loss.1} parent=1 // pred_check
      _
    $region7: #{vae_loss.1} parent=1 // pred_check_branch
      %20 = sbr.rel (0) target = $region9
    $region8: #{vae_loss.1} parent=1 // pred_region
      %s21 = sadd.s32 0, 0
      %p22 = scmp.lt.s32.totalorder %s21, 0
      %s23 = scalar_select %p22, %s21, 0
      %s24 = smul.addr %s23, 4
      %s25 = smul.addr %s24, 8
      %s26 = scalar_lea.vmem %s1, %s25
      %s27 = sadd.s32 0, 0
    $region9: #{vae_loss.1} parent=1 // pred_fallthru
      _
    // Predicated region
    $region10: #{vae_loss.1} parent=1 // pred_check
      _
    $region11: #{vae_loss.1} parent=1 // pred_check_branch
      %29 = sbr.rel (0) target = $region13
    $region12: #{vae_loss.1} parent=1 // pred_region
      _
    $region13: #{vae_loss.1} parent=1 // pred_fallthru
      _
    // Predicated region
    $region14: #{vae_loss.1} parent=1 // pred_check
      _
    $region15: #{vae_loss.1} parent=1 // pred_check_branch
      %31 = sbr.rel (0) target = $region17
    $region16: #{vae_loss.1} parent=1 // pred_region
      _
    $region17: #{vae_loss.1} parent=1 // pred_fallthru
      _
    %s32 = sadd.s32 0, 0
    %p33 = scmp.lt.s32.totalorder %s32, 0
    %s34 = scalar_select %p33, %s32, 0
    %s35 = smul.addr %s34, 4
    %s36 = smul.addr %s35, 8
    %s37 = scalar_lea.vmem %s0, %s36
    %s38 = sadd.s32 0, 0
    %p39 = scmp.lt.s32.totalorder %s38, 0
    %s40 = scalar_select %p39, %s38, 0
    %s41 = smul.addr %s40, 4
    %s42 = smul.addr %s41, 8
    %s43 = scalar_lea.vmem %s1, %s42
    %s44 = sadd.s32 0, 0
    %p45 = scmp.lt.s32.totalorder %s44, 0
    %s46 = scalar_select %p45, %s44, 0
    %s47 = smul.addr %s46, 4
    %s48 = smul.addr %s47, 8
    %s49 = scalar_lea.vmem %s0, %s48
    %s50 = sadd.s32 0, 0
    %s51 = sadd.s32 0, 0
    %p52 = scmp.lt.s32.totalorder %s51, 0
    %s53 = scalar_select %p52, %s51, 0
    %s54 = smul.addr %s53, 4
    %s55 = smul.addr %s54, 8
    %s56 = scalar_lea.vmem %s1, %s55
    %s57 = sadd.s32 0, 0
    %p58 = scmp.eq.s32.totalorder 0, 0
    // Predicated region
    $region18: #{vae_loss.1} parent=1 // pred_check
      %p59 = pneg %p58
    $region19: #{vae_loss.1} parent=1 // pred_check_branch
      %61 = sbr.rel (%p59) target = $region21
    $region20: #{vae_loss.1} parent=1 // pred_region
      %62 = vst [vmem:[#allocation2] sm:$0xff] 0.0
      %63 = vst [vmem:[#allocation2 + $0x8] sm:$0xff] 0.0
      %64 = vst [vmem:[#allocation2 + $0x10] sm:$0xff] 0.0
      %65 = vst [vmem:[#allocation2 + $0x18] sm:$0xff] 0.0
    $region21: #{vae_loss.1} parent=1 // pred_fallthru
      _
    %v66 = vld [vmem:[%s49] sm:$0xff]
    %v67 = vld [vmem:[%s49 + $0x8] sm:$0xff]
    %v68 = vld [vmem:[%s49 + $0x10] sm:$0xff]
    %v69 = vld [vmem:[%s49 + $0x18] sm:$0xff]
    %v70 = vld [vmem:[%s56] sm:$0xff]
    %v71 = vld [vmem:[%s56 + $0x8] sm:$0xff]
    %v72 = vld [vmem:[%s56 + $0x10] sm:$0xff]
    %v73 = vld [vmem:[%s56 + $0x18] sm:$0xff]
    %v74 = vsub.f32 %v70, %v66
    %v75 = vsub.f32 %v71, %v67
    %v76 = vsub.f32 %v72, %v68
    %v77 = vsub.f32 %v73, %v69
    %v78 = vmul.f32 %v74, %v74
    %v79 = vmul.f32 %v75, %v75
    %v80 = vmul.f32 %v76, %v76
    %v81 = vmul.f32 %v77, %v77
    %v82 = vld [vmem:[#allocation2] sm:$0xff]
    %v83 = vld [vmem:[#allocation2 + $0x8] sm:$0xff]
    %v84 = vld [vmem:[#allocation2 + $0x10] sm:$0xff]
    %v85 = vld [vmem:[#allocation2 + $0x18] sm:$0xff]
    %v86 = vadd.f32 %v78, 0.0
    %v87 = vadd.f32 %v79, 0.0
    %v88 = vadd.f32 %v80, 0.0
    %v89 = vadd.f32 %v81, 0.0
    %v90 = vadd.f32 %v82, %v86
    %v91 = vadd.f32 %v83, %v87
    %v92 = vadd.f32 %v84, %v88
    %v93 = vadd.f32 %v85, %v89
    %94 = vst [vmem:[#allocation2] sm:$0xff] %v90
    %95 = vst [vmem:[#allocation2 + $0x8] sm:$0xff] %v91
    %96 = vst [vmem:[#allocation2 + $0x10] sm:$0xff] %v92
    %97 = vst [vmem:[#allocation2 + $0x18] sm:$0xff] %v93
    // Predicated region
    $region22: #{vae_loss.1} parent=1 // pred_check
      %p98 = pneg %p58
    $region23: #{vae_loss.1} parent=1 // pred_check_branch
      %100 = sbr.rel (%p98) target = $region25
    $region24: #{vae_loss.1} parent=1 // pred_region
      %v101 = vld [vmem:[#allocation2] sm:$0xff]
      %v102 = vld [vmem:[#allocation2 + $0x8] sm:$0xff]
      %v103 = vld [vmem:[#allocation2 + $0x10] sm:$0xff]
      %v104 = vld [vmem:[#allocation2 + $0x18] sm:$0xff]
      %v105 = vadd.f32 %v101, %v102
      %v106 = vadd.f32 %v105, %v103
      %v107 = vadd.f32 %v106, %v104
      %108 = vadd.xlane.f32.xlu0 %v107
      %v109 = vpop.xlane.xlu0 %108
      %v110 = vrot.slane %v109, 4
      %v111 = vadd.f32 %v109, %v110
      %v112 = vrot.slane %v111, 2
      %v113 = vadd.f32 %v111, %v112
      %v114 = vrot.slane %v113, 1
      %v115 = vadd.f32 %v113, %v114
      %s116 = vtos %v115
      %s117 = smul.f32 %s116, 0.00048828125
      %s118 = scalar_lea.smem [#allocation3], 0
      %119 = sst [smem:[%s118]] %s117
      %p120 = scmp.eq.s32.totalorder 0, 0
      // Predicated region
      $region26: #{vae_loss.1} parent=24 // pred_check
        %p121 = pneg %p120
      $region27: #{vae_loss.1} parent=24 // pred_check_branch
        %123 = sbr.rel (%p121) target = $region29
      $region28: #{vae_loss.1} parent=24 // pred_region
        %v124 = vld [vmem:[%s2] sm:$0x3]
        %v125 = vld [vmem:[%s3] sm:$0x3]
        %v126 = vmax.f32 %v125, -100.0
        %v127 = vmin.f32 %v126, 100.0
        %v128 = vadd.f32 %v127, 1.0
        %v129 = vmul.f32 %v124, %v124
        %v130 = vsub.f32 %v128, %v129
        %v131 = vmul.f32 %v127, 1.442695
        %v132 = vpow.pop %v131
        %v133 = vsub.f32 %v130, %v132
        %vm134 = vcmask 254976
        %v135 = vsel %vm134, %v133, 0.0
        %136 = vadd.xlane.f32.xlu0 %v135
        %v137 = vpop.xlane.xlu0 %136
        %v138 = vrot.slane %v137, 4
        %v139 = vadd.f32 %v137, %v138
        %v140 = vrot.slane %v139, 2
        %v141 = vadd.f32 %v139, %v140
        %v142 = vrot.slane %v141, 1
        %v143 = vadd.f32 %v141, %v142
        %s144 = vtos %v143
        %s145 = smul.f32 %s144, 0.015625
        %s146 = smul.f32 %s145, -0.5
        %s147 = sadd.f32 %s117, %s146
        %148 = sst [smem:[%s118]] %s147
      $region29: #{vae_loss.1} parent=24 // pred_fallthru
        _
    $region25: #{vae_loss.1} parent=1 // pred_fallthru
      _
    // Predicated region
    $region30: #{vae_loss.1} parent=1 // pred_check
      _
    $region31: #{vae_loss.1} parent=1 // pred_check_branch
      %150 = sbr.rel (0) target = $region33
    $region32: #{vae_loss.1} parent=1 // pred_region
      %152 = vsyncadd [#allocation4], 0
      %s154 = sshll.u32 %s4, 4
      %s155 = int_to_ptr.hbm [resolvable:$true] %s154
      %157 = dma.smem_to_hbm [#allocation3], 16, %s155, [#allocation4]
    $region33: #{vae_loss.1} parent=1 // pred_fallthru
      _
    // Predicated region
    $region34: #{vae_loss.1} parent=1 // pred_check
      _
    $region35: #{vae_loss.1} parent=1 // pred_check_branch
      %159 = sbr.rel (0) target = $region37
    $region36: #{vae_loss.1} parent=1 // pred_region
      %161 = dma.done [#allocation4], 16
    $region37: #{vae_loss.1} parent=1 // pred_fallthru
      _
    %162 = sfence
    %163 = vsyncpa [#allocation4], 1

</llo_original>
